<compile_context>
chip_gen: v6e
topology: v6e:2x2x1
jax: 0.10.0
libtpu: 0.0.40
codegen_flags: <defaults>
</compile_context>

<pallas_src>
import jax
import jax.numpy as jnp
from jax.experimental import pallas as pl
from jax.experimental.pallas import tpu as pltpu

D_IN, D_H1, D_H2, D_H3, D_OUT = 64, 128, 256, 128, 10
D_OUT_PAD = 128  # lane-dense output width (last layer padded 10 -> 128)


def _round_up(n, m):
    return (n + m - 1) // m * m


def _mlp_kernel(x_ref, w1_ref, b1_ref, w2_ref, b2_ref,
                w3_ref, b3_ref, w4_ref, b4_ref, o_ref):
    # One batch tile of the fused 4-layer MLP.
    # Weights are bf16 (MXU-native), biases and accumulation are f32.
    x = x_ref[...].astype(jnp.bfloat16)                                  # [TB, 64]
    h = jnp.dot(x, w1_ref[...], preferred_element_type=jnp.float32)     # [TB, 128]
    h = jnp.maximum(h + b1_ref[...], 0.0)
    h = jnp.dot(h.astype(jnp.bfloat16), w2_ref[...],
                preferred_element_type=jnp.float32)                      # [TB, 256]
    h = jnp.maximum(h + b2_ref[...], 0.0)
    h = jnp.dot(h.astype(jnp.bfloat16), w3_ref[...],
                preferred_element_type=jnp.float32)                      # [TB, 128]
    h = jnp.maximum(h + b3_ref[...], 0.0)
    out = jnp.dot(h.astype(jnp.bfloat16), w4_ref[...],
                  preferred_element_type=jnp.float32)                    # [TB, 128]
    o_ref[...] = out + b4_ref[...]


def mlp_forward(x, params, block_b=512):
    """x: [B, 64] float32. params: dict of f32 (in,out) weights and (1,out) biases."""
    B, d_in = x.shape
    assert d_in == D_IN

    # Batch tile: multiple of 8 sublanes; 512 rows keeps
    # (x tile + out tile + [TB,256] f32 intermediate) well under v5e's 16 MiB
    # scoped VMEM and v7x's shared 64 MiB physical VMEM.
    tb = min(block_b, _round_up(B, 8))
    b_pad = _round_up(B, tb)
    if b_pad != B:
        x = jnp.pad(x, ((0, b_pad - B), (0, 0)))

    # bf16 weights (f32 accumulate in the kernel); last layer padded to 128
    # output columns so the output store is lane-dense. Biases stay f32.
    w1 = params["w1"].astype(jnp.bfloat16)
    w2 = params["w2"].astype(jnp.bfloat16)
    w3 = params["w3"].astype(jnp.bfloat16)
    w4 = jnp.pad(params["w4"], ((0, 0), (0, D_OUT_PAD - D_OUT))).astype(jnp.bfloat16)
    b1, b2, b3 = params["b1"], params["b2"], params["b3"]
    b4 = jnp.pad(params["b4"], ((0, 0), (0, D_OUT_PAD - D_OUT)))

    grid = (b_pad // tb,)
    const = lambda i: (0, 0)   # params resident in VMEM across all grid steps
    row = lambda i: (i, 0)     # batch-tiled arrays

    flops = 2 * b_pad * (D_IN * D_H1 + D_H1 * D_H2 + D_H2 * D_H3 + D_H3 * D_OUT_PAD)
    param_bytes = sum(int(a.size) * a.dtype.itemsize
                      for a in (w1, b1, w2, b2, w3, b3, w4, b4))
    bytes_accessed = b_pad * (D_IN + D_OUT_PAD) * 4 + param_bytes

    out = pl.pallas_call(
        _mlp_kernel,
        out_shape=jax.ShapeDtypeStruct((b_pad, D_OUT_PAD), jnp.float32),
        grid=grid,
        in_specs=[
            pl.BlockSpec((tb, D_IN), row),        # x
            pl.BlockSpec((D_IN, D_H1), const),    # w1
            pl.BlockSpec((1, D_H1), const),       # b1
            pl.BlockSpec((D_H1, D_H2), const),    # w2
            pl.BlockSpec((1, D_H2), const),       # b2
            pl.BlockSpec((D_H2, D_H3), const),    # w3
            pl.BlockSpec((1, D_H3), const),       # b3
            pl.BlockSpec((D_H3, D_OUT_PAD), const),  # w4 (padded)
            pl.BlockSpec((1, D_OUT_PAD), const),     # b4 (padded)
        ],
        out_specs=pl.BlockSpec((tb, D_OUT_PAD), row),
        compiler_params=pltpu.CompilerParams(
            dimension_semantics=("parallel",)),
        cost_estimate=pl.CostEstimate(flops=flops, transcendentals=0,
                                      bytes_accessed=bytes_accessed),
    )(x, w1, b1, w2, b2, w3, b3, w4, b4)

    return out[:B, :D_OUT]


def init_params(key):
    """Deterministic init mimicking PyTorch nn.Linear default (U[-1/sqrt(fan_in), +])."""
    dims = [(D_IN, D_H1), (D_H1, D_H2), (D_H2, D_H3), (D_H3, D_OUT)]
    params = {}
    keys = jax.random.split(key, 2 * len(dims))
    for i, (fan_in, fan_out) in enumerate(dims):
        bound = 1.0 / (fan_in ** 0.5)
        w = jax.random.uniform(keys[2 * i], (fan_in, fan_out),
                               minval=-bound, maxval=bound, dtype=jnp.float32)
        b = jax.random.uniform(keys[2 * i + 1], (1, fan_out),
                               minval=-bound, maxval=bound, dtype=jnp.float32)
        params[f"w{i + 1}"] = w
        params[f"b{i + 1}"] = b
    return params


def reference_forward(x, params):
    """Pure f32 reference (matches the PyTorch module exactly)."""
    h = jnp.maximum(x @ params["w1"] + params["b1"], 0.0)
    h = jnp.maximum(h @ params["w2"] + params["b2"], 0.0)
    h = jnp.maximum(h @ params["w3"] + params["b3"], 0.0)
    return h @ params["w4"] + params["b4"]


def reference_forward_bf16(x, params):
    """Reference with the same bf16-operand / f32-accumulate arithmetic as the kernel."""
    bf = jnp.bfloat16
    h = jnp.dot(x.astype(bf), params["w1"].astype(bf),
                preferred_element_type=jnp.float32)
    h = jnp.maximum(h + params["b1"], 0.0)
    h = jnp.dot(h.astype(bf), params["w2"].astype(bf),
                preferred_element_type=jnp.float32)
    h = jnp.maximum(h + params["b2"], 0.0)
    h = jnp.dot(h.astype(bf), params["w3"].astype(bf),
                preferred_element_type=jnp.float32)
    h = jnp.maximum(h + params["b3"], 0.0)
    return jnp.dot(h.astype(bf), params["w4"].astype(bf),
                   preferred_element_type=jnp.float32) + params["b4"]


if __name__ == "__main__":
    key = jax.random.PRNGKey(0)
    kx, kp = jax.random.split(key)
    params = init_params(kp)

    # Small case consistent with the module (x: [8, 64]) — single grid step.
    B = 8
    x = jax.random.normal(kx, (B, D_IN), dtype=jnp.float32)
    out = jax.block_until_ready(mlp_forward(x, params))
    assert out.shape == (B, D_OUT), out.shape
    ref_bf16 = reference_forward_bf16(x, params)
    ref_f32 = reference_forward(x, params)
    assert jnp.allclose(out, ref_bf16, atol=2e-3, rtol=2e-3), "mismatch vs bf16 reference"
    assert jnp.allclose(out, ref_f32, atol=5e-2, rtol=5e-2), "mismatch vs f32 reference"

    # Larger case exercising the batch grid (2 steps) + ragged-batch padding.
    B2 = 1000
    x2 = jax.random.normal(jax.random.PRNGKey(1), (B2, D_IN), dtype=jnp.float32)
    out2 = jax.block_until_ready(mlp_forward(x2, params, block_b=512))
    assert out2.shape == (B2, D_OUT), out2.shape
    ref2 = reference_forward_bf16(x2, params)
    assert jnp.allclose(out2, ref2, atol=2e-3, rtol=2e-3), "mismatch vs bf16 reference (B=1000)"

    print("KERNEL_OK")
</pallas_src>

<mosaic_0001>
module attributes {stable_mosaic.version = 11 : i64} {
  func.func @_mlp_kernel(%arg0: i32, %arg1: memref<8x64xf32, #tpu.memory_space<vmem>>, %arg2: memref<64x128xbf16, #tpu.memory_space<vmem>>, %arg3: memref<1x128xf32, #tpu.memory_space<vmem>>, %arg4: memref<128x256xbf16, #tpu.memory_space<vmem>>, %arg5: memref<1x256xf32, #tpu.memory_space<vmem>>, %arg6: memref<256x128xbf16, #tpu.memory_space<vmem>>, %arg7: memref<1x128xf32, #tpu.memory_space<vmem>>, %arg8: memref<128x128xbf16, #tpu.memory_space<vmem>>, %arg9: memref<1x128xf32, #tpu.memory_space<vmem>>, %arg10: memref<8x128xf32, #tpu.memory_space<vmem>>) attributes {dimension_semantics = [#tpu.dimension_semantics<parallel>], iteration_bounds = array<i64: 1>, scalar_prefetch = 0 : i64, scratch_operands = 0 : i64, tpu.core_type = #tpu.core_type<tc>, window_params = [{transform_indices = @transform_0, window_bounds = array<i64: 8, 64>}, {pipeline_mode = #tpu.pipeline_mode<synchronous>, transform_indices = @transform_1, window_bounds = array<i64: 64, 128>}, {pipeline_mode = #tpu.pipeline_mode<synchronous>, transform_indices = @transform_2, window_bounds = array<i64: 1, 128>}, {pipeline_mode = #tpu.pipeline_mode<synchronous>, transform_indices = @transform_3, window_bounds = array<i64: 128, 256>}, {pipeline_mode = #tpu.pipeline_mode<synchronous>, transform_indices = @transform_4, window_bounds = array<i64: 1, 256>}, {pipeline_mode = #tpu.pipeline_mode<synchronous>, transform_indices = @transform_5, window_bounds = array<i64: 256, 128>}, {pipeline_mode = #tpu.pipeline_mode<synchronous>, transform_indices = @transform_6, window_bounds = array<i64: 1, 128>}, {pipeline_mode = #tpu.pipeline_mode<synchronous>, transform_indices = @transform_7, window_bounds = array<i64: 128, 128>}, {pipeline_mode = #tpu.pipeline_mode<synchronous>, transform_indices = @transform_8, window_bounds = array<i64: 1, 128>}, {transform_indices = @transform_9, window_bounds = array<i64: 8, 128>}]} {
    %c0 = arith.constant 0 : index
    %c0_0 = arith.constant 0 : index
    %0 = vector.load %arg1[%c0, %c0_0] : memref<8x64xf32, #tpu.memory_space<vmem>>, vector<8x64xf32>
    %1 = arith.truncf %0 : vector<8x64xf32> to vector<8x64xbf16>
    %c0_1 = arith.constant 0 : index
    %c0_2 = arith.constant 0 : index
    %2 = vector.load %arg2[%c0_1, %c0_2] : memref<64x128xbf16, #tpu.memory_space<vmem>>, vector<64x128xbf16>
    %cst = arith.constant dense<0.000000e+00> : vector<8x128xf32>
    %3 = tpu.matmul %1, %2, %cst {dimension_numbers = #tpu.dot_dimension_numbers<[1], [0], [0], [1], [0, 0, 1, 1], [], []>} : vector<8x64xbf16>, vector<64x128xbf16>, vector<8x128xf32> -> vector<8x128xf32>
    %c0_3 = arith.constant 0 : index
    %c0_4 = arith.constant 0 : index
    %4 = vector.load %arg3[%c0_3, %c0_4] : memref<1x128xf32, #tpu.memory_space<vmem>>, vector<1x128xf32>
    %5 = vector.broadcast %4 : vector<1x128xf32> to vector<8x128xf32>
    %6 = arith.addf %3, %5 : vector<8x128xf32>
    %cst_5 = arith.constant 0.000000e+00 : f32
    %7 = vector.broadcast %cst_5 : f32 to vector<8x128xf32>
    %8 = arith.maximumf %6, %7 : vector<8x128xf32>
    %9 = arith.truncf %8 : vector<8x128xf32> to vector<8x128xbf16>
    %c0_6 = arith.constant 0 : index
    %c0_7 = arith.constant 0 : index
    %10 = vector.load %arg4[%c0_6, %c0_7] : memref<128x256xbf16, #tpu.memory_space<vmem>>, vector<128x256xbf16>
    %cst_8 = arith.constant dense<0.000000e+00> : vector<8x256xf32>
    %11 = tpu.matmul %9, %10, %cst_8 {dimension_numbers = #tpu.dot_dimension_numbers<[1], [0], [0], [1], [0, 0, 1, 1], [], []>} : vector<8x128xbf16>, vector<128x256xbf16>, vector<8x256xf32> -> vector<8x256xf32>
    %c0_9 = arith.constant 0 : index
    %c0_10 = arith.constant 0 : index
    %12 = vector.load %arg5[%c0_9, %c0_10] : memref<1x256xf32, #tpu.memory_space<vmem>>, vector<1x256xf32>
    %13 = vector.broadcast %12 : vector<1x256xf32> to vector<8x256xf32>
    %14 = arith.addf %11, %13 : vector<8x256xf32>
    %cst_11 = arith.constant 0.000000e+00 : f32
    %15 = vector.broadcast %cst_11 : f32 to vector<8x256xf32>
    %16 = arith.maximumf %14, %15 : vector<8x256xf32>
    %17 = arith.truncf %16 : vector<8x256xf32> to vector<8x256xbf16>
    %c0_12 = arith.constant 0 : index
    %c0_13 = arith.constant 0 : index
    %18 = vector.load %arg6[%c0_12, %c0_13] : memref<256x128xbf16, #tpu.memory_space<vmem>>, vector<256x128xbf16>
    %cst_14 = arith.constant dense<0.000000e+00> : vector<8x128xf32>
    %19 = tpu.matmul %17, %18, %cst_14 {dimension_numbers = #tpu.dot_dimension_numbers<[1], [0], [0], [1], [0, 0, 1, 1], [], []>} : vector<8x256xbf16>, vector<256x128xbf16>, vector<8x128xf32> -> vector<8x128xf32>
    %c0_15 = arith.constant 0 : index
    %c0_16 = arith.constant 0 : index
    %20 = vector.load %arg7[%c0_15, %c0_16] : memref<1x128xf32, #tpu.memory_space<vmem>>, vector<1x128xf32>
    %21 = vector.broadcast %20 : vector<1x128xf32> to vector<8x128xf32>
    %22 = arith.addf %19, %21 : vector<8x128xf32>
    %cst_17 = arith.constant 0.000000e+00 : f32
    %23 = vector.broadcast %cst_17 : f32 to vector<8x128xf32>
    %24 = arith.maximumf %22, %23 : vector<8x128xf32>
    %25 = arith.truncf %24 : vector<8x128xf32> to vector<8x128xbf16>
    %c0_18 = arith.constant 0 : index
    %c0_19 = arith.constant 0 : index
    %26 = vector.load %arg8[%c0_18, %c0_19] : memref<128x128xbf16, #tpu.memory_space<vmem>>, vector<128x128xbf16>
    %cst_20 = arith.constant dense<0.000000e+00> : vector<8x128xf32>
    %27 = tpu.matmul %25, %26, %cst_20 {dimension_numbers = #tpu.dot_dimension_numbers<[1], [0], [0], [1], [0, 0, 1, 1], [], []>} : vector<8x128xbf16>, vector<128x128xbf16>, vector<8x128xf32> -> vector<8x128xf32>
    %c0_21 = arith.constant 0 : index
    %c0_22 = arith.constant 0 : index
    %28 = vector.load %arg9[%c0_21, %c0_22] : memref<1x128xf32, #tpu.memory_space<vmem>>, vector<1x128xf32>
    %29 = vector.broadcast %28 : vector<1x128xf32> to vector<8x128xf32>
    %30 = arith.addf %27, %29 : vector<8x128xf32>
    %c0_23 = arith.constant 0 : index
    %c0_24 = arith.constant 0 : index
    %31 = vector.load %arg10[%c0_23, %c0_24] : memref<8x128xf32, #tpu.memory_space<vmem>>, vector<8x128xf32>
    tpu.vector_store %arg10[%c0_23, %c0_24], %30 {strides = array<i32>} : memref<8x128xf32, #tpu.memory_space<vmem>>, vector<8x128xf32>,
    return
  }
  func.func @transform_0(%arg0: i32) -> (i32, i32) {
    %c0_i32 = arith.constant 0 : i32
    %c0_i32_0 = arith.constant 0 : i32
    return %arg0, %c0_i32 : i32, i32
  }
  func.func @transform_1(%arg0: i32) -> (i32, i32) {
    %c0_i32 = arith.constant 0 : i32
    %c0_i32_0 = arith.constant 0 : i32
    %c0_i32_1 = arith.constant 0 : i32
    return %c0_i32, %c0_i32_0 : i32, i32
  }
  func.func @transform_2(%arg0: i32) -> (i32, i32) {
    %c0_i32 = arith.constant 0 : i32
    %c0_i32_0 = arith.constant 0 : i32
    %c0_i32_1 = arith.constant 0 : i32
    return %c0_i32, %c0_i32_0 : i32, i32
  }
  func.func @transform_3(%arg0: i32) -> (i32, i32) {
    %c0_i32 = arith.constant 0 : i32
    %c0_i32_0 = arith.constant 0 : i32
    %c0_i32_1 = arith.constant 0 : i32
    return %c0_i32, %c0_i32_0 : i32, i32
  }
  func.func @transform_4(%arg0: i32) -> (i32, i32) {
    %c0_i32 = arith.constant 0 : i32
    %c0_i32_0 = arith.constant 0 : i32
    %c0_i32_1 = arith.constant 0 : i32
    return %c0_i32, %c0_i32_0 : i32, i32
  }
  func.func @transform_5(%arg0: i32) -> (i32, i32) {
    %c0_i32 = arith.constant 0 : i32
    %c0_i32_0 = arith.constant 0 : i32
    %c0_i32_1 = arith.constant 0 : i32
    return %c0_i32, %c0_i32_0 : i32, i32
  }
  func.func @transform_6(%arg0: i32) -> (i32, i32) {
    %c0_i32 = arith.constant 0 : i32
    %c0_i32_0 = arith.constant 0 : i32
    %c0_i32_1 = arith.constant 0 : i32
    return %c0_i32, %c0_i32_0 : i32, i32
  }
  func.func @transform_7(%arg0: i32) -> (i32, i32) {
    %c0_i32 = arith.constant 0 : i32
    %c0_i32_0 = arith.constant 0 : i32
    %c0_i32_1 = arith.constant 0 : i32
    return %c0_i32, %c0_i32_0 : i32, i32
  }
  func.func @transform_8(%arg0: i32) -> (i32, i32) {
    %c0_i32 = arith.constant 0 : i32
    %c0_i32_0 = arith.constant 0 : i32
    %c0_i32_1 = arith.constant 0 : i32
    return %c0_i32, %c0_i32_0 : i32, i32
  }
  func.func @transform_9(%arg0: i32) -> (i32, i32) {
    %c0_i32 = arith.constant 0 : i32
    %c0_i32_0 = arith.constant 0 : i32
    return %arg0, %c0_i32 : i32, i32
  }
}

</mosaic_0001>

<llo_original>
// kernel: tpu_custom_call.1
$region0: #{tpu_custom_call.1}
  #allocation0 [shape = 'u32[]', space=smem, size = 0x4, offset = 0x4, fixed_abs, tag = 'smem constant byte address 0x4 - core index']
  #allocation1 [shape = 'u32[144,128]{1,0:T(1,128)}', space=vmem, size = 0x12000, scoped, tag = 'internal scratch']
  %s0 = inlined_call_operand.hbm [shape: f32[8,64], index: 0, kind: input, shape index: {}]
  %s1 = inlined_call_operand.hbm [shape: bf16[64,128], index: 1, kind: input, shape index: {}]
  %s2 = inlined_call_operand.vmem [shape: f32[1,128], index: 2, kind: input, shape index: {}]
  %s3 = inlined_call_operand.hbm [shape: bf16[128,256], index: 3, kind: input, shape index: {}]
  %s4 = inlined_call_operand.vmem [shape: f32[1,256], index: 4, kind: input, shape index: {}]
  %s5 = inlined_call_operand.hbm [shape: bf16[256,128], index: 5, kind: input, shape index: {}]
  %s6 = inlined_call_operand.vmem [shape: f32[1,128], index: 6, kind: input, shape index: {}]
  %s7 = inlined_call_operand.hbm [shape: bf16[128,128], index: 7, kind: input, shape index: {}]
  %s8 = inlined_call_operand.vmem [shape: f32[1,128], index: 8, kind: input, shape index: {}]
  %s9 = inlined_call_operand.hbm [shape: f32[8,128], index: 9, kind: output, shape index: {}]
  %s10 = sld [smem:[#allocation0]]
  $region66: #{tpu_custom_call.1} parent=0
    _
  %s12 = ssub.s32 1, %s10
  %s13 = scalar_select 0, %s12, %s10
  $region1: #{tpu_custom_call.1} parent=0
    #allocation2 [shape = 'u8[4096]{0}', space=vmem, size = 0x1000, scoped, tag = 'input window, operand 0, single buffered']
    #allocation3 [shape = 's32[1]{0}', space=sflag, size = 0x4, scoped, tag = 'scoped memory for tpu_custom_call.1']
    #allocation4 [shape = 's32[1]{0}', space=sflag, size = 0x4, scoped, tag = 'scoped memory for tpu_custom_call.1']
    #allocation5 [shape = 'u8[16384]{0}', space=vmem, size = 0x4000, scoped, tag = 'input window, operand 1, single buffered']
    #allocation6 [shape = 's32[1]{0}', space=sflag, size = 0x4, scoped, tag = 'scoped memory for tpu_custom_call.1']
    #allocation7 [shape = 'u8[65536]{0}', space=vmem, size = 0x10000, scoped, tag = 'input window, operand 3, single buffered']
    #allocation8 [shape = 'u8[65536]{0}', space=vmem, size = 0x10000, scoped, tag = 'input window, operand 5, single buffered']
    #allocation9 [shape = 's32[1]{0}', space=sflag, size = 0x4, scoped, tag = 'scoped memory for tpu_custom_call.1']
    #allocation10 [shape = 'u8[32768]{0}', space=vmem, size = 0x8000, scoped, tag = 'input window, operand 7, single buffered']
    #allocation11 [shape = 'u8[4096]{0}', space=vmem, size = 0x1000, scoped, tag = 'output window, operand 0, single buffered']
    %14 = vsyncpa [#allocation3], 0
    %15 = vsyncpa [#allocation6], 0
    %16 = vsyncpa [#allocation9], 0
    %17 = vsyncpa [#allocation4], 0
    // Predicated region
    $region2: #{tpu_custom_call.1} parent=1 // pred_check
      _
    $region3: #{tpu_custom_call.1} parent=1 // pred_check_branch
      %19 = sbr.rel (0) target = $region5
    $region4: #{tpu_custom_call.1} parent=1 // pred_region
      %s21 = ssub.s32 128, 128
      %22 = vsyncadd [#allocation3], %s21
      %s24 = sshll.u32 [#allocation2], 4
      %s25 = int_to_ptr.vmem [resolvable:$true] %s24
      %27 = dma.hbm_to_vmem [thread:$0]  %s0, 128, %s25, [#allocation3]
    $region5: #{tpu_custom_call.1} parent=1 // pred_fallthru
      _
    // Predicated region
    $region6: #{tpu_custom_call.1} parent=1 // pred_check
      _
    $region7: #{tpu_custom_call.1} parent=1 // pred_check_branch
      %29 = sbr.rel (0) target = $region9
    $region8: #{tpu_custom_call.1} parent=1 // pred_region
      %s31 = ssub.s32 512, 512
      %32 = vsyncadd [#allocation6], %s31
      %s33 = sshll.u32 [#allocation5], 4
      %s34 = int_to_ptr.vmem [resolvable:$true] %s33
      %39 = dma.hbm_to_vmem [thread:$0]  %s1, 512, %s34, [#allocation6], 64, 64, 4
    $region9: #{tpu_custom_call.1} parent=1 // pred_fallthru
      _
    // Predicated region
    $region10: #{tpu_custom_call.1} parent=1 // pred_check
      _
    $region11: #{tpu_custom_call.1} parent=1 // pred_check_branch
      %41 = sbr.rel (0) target = $region13
    $region12: #{tpu_custom_call.1} parent=1 // pred_region
      _
    $region13: #{tpu_custom_call.1} parent=1 // pred_fallthru
      _
    // Predicated region
    $region14: #{tpu_custom_call.1} parent=1 // pred_check
      _
    $region15: #{tpu_custom_call.1} parent=1 // pred_check_branch
      %43 = sbr.rel (0) target = $region17
    $region16: #{tpu_custom_call.1} parent=1 // pred_region
      %s45 = ssub.s32 2048, 2048
      %46 = vsyncadd [#allocation6], %s45
      %s47 = sshll.u32 [#allocation7], 4
      %s48 = int_to_ptr.vmem [resolvable:$true] %s47
      %53 = dma.hbm_to_vmem [thread:$0]  %s3, 2048, %s48, [#allocation6], 128, 128, 8
    $region17: #{tpu_custom_call.1} parent=1 // pred_fallthru
      _
    // Predicated region
    $region18: #{tpu_custom_call.1} parent=1 // pred_check
      _
    $region19: #{tpu_custom_call.1} parent=1 // pred_check_branch
      %55 = sbr.rel (0) target = $region21
    $region20: #{tpu_custom_call.1} parent=1 // pred_region
      _
    $region21: #{tpu_custom_call.1} parent=1 // pred_fallthru
      _
    // Predicated region
    $region22: #{tpu_custom_call.1} parent=1 // pred_check
      _
    $region23: #{tpu_custom_call.1} parent=1 // pred_check_branch
      %57 = sbr.rel (0) target = $region25
    $region24: #{tpu_custom_call.1} parent=1 // pred_region
      %s59 = ssub.s32 2048, 2048
      %60 = vsyncadd [#allocation9], %s59
      %s61 = sshll.u32 [#allocation8], 4
      %s62 = int_to_ptr.vmem [resolvable:$true] %s61
      %67 = dma.hbm_to_vmem [thread:$0]  %s5, 2048, %s62, [#allocation9], 64, 64, 4
    $region25: #{tpu_custom_call.1} parent=1 // pred_fallthru
      _
    // Predicated region
    $region26: #{tpu_custom_call.1} parent=1 // pred_check
      _
    $region27: #{tpu_custom_call.1} parent=1 // pred_check_branch
      %69 = sbr.rel (0) target = $region29
    $region28: #{tpu_custom_call.1} parent=1 // pred_region
      _
    $region29: #{tpu_custom_call.1} parent=1 // pred_fallthru
      _
    // Predicated region
    $region30: #{tpu_custom_call.1} parent=1 // pred_check
      _
    $region31: #{tpu_custom_call.1} parent=1 // pred_check_branch
      %71 = sbr.rel (0) target = $region33
    $region32: #{tpu_custom_call.1} parent=1 // pred_region
      %s73 = ssub.s32 1024, 1024
      %74 = vsyncadd [#allocation9], %s73
      %s75 = sshll.u32 [#allocation10], 4
      %s76 = int_to_ptr.vmem [resolvable:$true] %s75
      %81 = dma.hbm_to_vmem [thread:$0]  %s7, 1024, %s76, [#allocation9], 64, 64, 4
    $region33: #{tpu_custom_call.1} parent=1 // pred_fallthru
      _
    // Predicated region
    $region34: #{tpu_custom_call.1} parent=1 // pred_check
      _
    $region35: #{tpu_custom_call.1} parent=1 // pred_check_branch
      %83 = sbr.rel (0) target = $region37
    $region36: #{tpu_custom_call.1} parent=1 // pred_region
      _
    $region37: #{tpu_custom_call.1} parent=1 // pred_fallthru
      _
    // Predicated region
    $region38: #{tpu_custom_call.1} parent=1 // pred_check
      _
    $region39: #{tpu_custom_call.1} parent=1 // pred_check_branch
      %85 = sbr.rel (0) target = $region41
    $region40: #{tpu_custom_call.1} parent=1 // pred_region
      %86 = dma.done [#allocation3], 128
    $region41: #{tpu_custom_call.1} parent=1 // pred_fallthru
      _
    // Predicated region
    $region42: #{tpu_custom_call.1} parent=1 // pred_check
      _
    $region43: #{tpu_custom_call.1} parent=1 // pred_check_branch
      %88 = sbr.rel (0) target = $region45
    $region44: #{tpu_custom_call.1} parent=1 // pred_region
      %89 = dma.done [#allocation6], 512
    $region45: #{tpu_custom_call.1} parent=1 // pred_fallthru
      _
    // Predicated region
    $region46: #{tpu_custom_call.1} parent=1 // pred_check
      _
    $region47: #{tpu_custom_call.1} parent=1 // pred_check_branch
      %91 = sbr.rel (0) target = $region49
    $region48: #{tpu_custom_call.1} parent=1 // pred_region
      %92 = dma.done [#allocation6], 2048
    $region49: #{tpu_custom_call.1} parent=1 // pred_fallthru
      _
    // Predicated region
    $region50: #{tpu_custom_call.1} parent=1 // pred_check
      _
    $region51: #{tpu_custom_call.1} parent=1 // pred_check_branch
      %94 = sbr.rel (0) target = $region53
    $region52: #{tpu_custom_call.1} parent=1 // pred_region
      %95 = dma.done [#allocation9], 2048
    $region53: #{tpu_custom_call.1} parent=1 // pred_fallthru
      _
    // Predicated region
    $region54: #{tpu_custom_call.1} parent=1 // pred_check
      _
    $region55: #{tpu_custom_call.1} parent=1 // pred_check_branch
      %97 = sbr.rel (0) target = $region57
    $region56: #{tpu_custom_call.1} parent=1 // pred_region
      %98 = dma.done [#allocation9], 1024
    $region57: #{tpu_custom_call.1} parent=1 // pred_fallthru
      _
    %v100 = vld [vmem:[#allocation2] sm:$0xff]
    %v101 = vpack.c.bf16 %v100, %v100
    %v102 = vld [vmem:[#allocation5] sm:$0xf]
    %v103 = vld [vmem:[#allocation5 + $0x4] sm:$0xf]
    %v104 = vld [vmem:[#allocation5 + $0x8] sm:$0xf]
    %v105 = vld [vmem:[#allocation5 + $0xc] sm:$0xf]
    %v106 = vld [vmem:[#allocation5 + $0x10] sm:$0xf]
    %v107 = vld [vmem:[#allocation5 + $0x14] sm:$0xf]
    %v108 = vld [vmem:[#allocation5 + $0x18] sm:$0xf]
    %v109 = vld [vmem:[#allocation5 + $0x1c] sm:$0xf]
    %v110 = vld [vmem:[%s2] sm:$0x1]
    %v112 = vlaneseq
    %v113 = vshrl.u32 %v112, 7
    %v114 = vsub.s32 0, %v113
    %v115 = vrot.slane %v110, %v114
    %v125 = vunpack.c.l.b16 %v102
    %v126 = vunpack.c.l.b16 %v103
    %v127 = vunpack.c.l.b16 %v104
    %v128 = vunpack.c.l.b16 %v105
    %v129 = vunpack.c.l.b16 %v106
    %v130 = vunpack.c.l.b16 %v107
    %v131 = vunpack.c.l.b16 %v108
    %v132 = vunpack.c.l.b16 %v109
    %v133 = vpack.c.b16 %v126, %v125
    %v134 = vpack.c.b16 %v128, %v127
    %v135 = vpack.c.b16 %v130, %v129
    %v136 = vpack.c.b16 %v132, %v131
    %vm141 = vcmask 523264
    %v143 = vsel %vm141, %v101, 0
    %145 = vmatprep.subr.bf16.mxu0 0
    %146 = vmatpush1.bf16.msra.mxu0 0
    %147 = vmatprep.subr.bf16.mxu0 0
    %148 = vmatpush1.bf16.msra.mxu0 0
    %149 = vmatprep.subr.bf16.mxu0 0
    %150 = vmatpush1.bf16.msra.mxu0 0
    %151 = vmatprep.subr.bf16.mxu0 0
    %152 = vmatpush1.bf16.msra.mxu0 0
    %153 = vmatprep.subr.bf16.mxu0 0
    %154 = vmatpush1.bf16.msra.mxu0 %v136
    %155 = vmatprep.subr.bf16.mxu0 0
    %156 = vmatpush1.bf16.msra.mxu0 %v135
    %157 = vmatprep.subr.bf16.mxu0 0
    %158 = vmatpush1.bf16.msra.mxu0 %v134
    %159 = vmatprep.subr.bf16.mxu0 0
    %160 = vmatpush1.bf16.msra.mxu0 %v133
    %161 = vmatprep.subr.bf16.mxu0 0
    %162 = vmatpush2.bf16.msra.mxu0 0
    %163 = vmatprep.subr.bf16.mxu0 0
    %164 = vmatpush2.bf16.msra.mxu0 0
    %165 = vmatprep.subr.bf16.mxu0 0
    %166 = vmatpush2.bf16.msra.mxu0 0
    %167 = vmatprep.subr.bf16.mxu0 0
    %168 = vmatpush2.bf16.msra.mxu0 0
    %169 = vmatprep.subr.bf16.mxu0 0
    %170 = vmatpush2.bf16.msra.mxu0 0
    %171 = vmatprep.subr.bf16.mxu0 0
    %172 = vmatpush2.bf16.msra.mxu0 0
    %173 = vmatprep.subr.bf16.mxu0 0
    %174 = vmatpush2.bf16.msra.mxu0 0
    %175 = vmatprep.subr.bf16.mxu0 0
    %176 = vmatpush2.bf16.msra.mxu0 0
    %177 = vmatprep.mubr.bf16.mxu0 0
    %178 = vmatmul.mubr.bf16.gmra.mxu0 %v143
    %v179 = vpop.f32.mrf.mxu0
    %v180 = vadd.f32 %v115, %v179
    %v181 = vpop.f32.mrf.mxu0
    %v182 = vpop.f32.mrf.mxu0
    %v183 = vpop.f32.mrf.mxu0
    %184 = vdwg.mxu0
    %v185 = vmax.f32 %v180, 0.0
    %v186 = vpack.c.bf16 %v185, %v185
    %v187 = vld [vmem:[#allocation7] sm:$0xff]
    %v188 = vld [vmem:[#allocation7 + $0x8] sm:$0xff]
    %v189 = vld [vmem:[#allocation7 + $0x10] sm:$0xff]
    %v190 = vld [vmem:[#allocation7 + $0x18] sm:$0xff]
    %v191 = vld [vmem:[#allocation7 + $0x20] sm:$0xff]
    %v192 = vld [vmem:[#allocation7 + $0x28] sm:$0xff]
    %v193 = vld [vmem:[#allocation7 + $0x30] sm:$0xff]
    %v194 = vld [vmem:[#allocation7 + $0x38] sm:$0xff]
    %v195 = vld [vmem:[#allocation7 + $0x40] sm:$0xff]
    %v196 = vld [vmem:[#allocation7 + $0x48] sm:$0xff]
    %v197 = vld [vmem:[#allocation7 + $0x50] sm:$0xff]
    %v198 = vld [vmem:[#allocation7 + $0x58] sm:$0xff]
    %v199 = vld [vmem:[#allocation7 + $0x60] sm:$0xff]
    %v200 = vld [vmem:[#allocation7 + $0x68] sm:$0xff]
    %v201 = vld [vmem:[#allocation7 + $0x70] sm:$0xff]
    %v202 = vld [vmem:[#allocation7 + $0x78] sm:$0xff]
    %v203 = vld [vmem:[%s4] sm:$0x3]
    %v205 = vlaneseq
    %v206 = vshrl.u32 %v205, 7
    %v207 = vsub.s32 0, %v206
    %v208 = vrot.slane %v203, %v207
    %v209 = vlaneseq
    %v210 = vshrl.u32 %v209, 7
    %v211 = vsub.s32 1, %v210
    %v212 = vrot.slane %v203, %v211
    %v231 = vunpack.c.l.b16 %v187
    %v232 = vunpack.c.h.b16 %v187
    %v233 = vunpack.c.l.b16 %v188
    %v234 = vunpack.c.h.b16 %v188
    %v235 = vunpack.c.l.b16 %v189
    %v236 = vunpack.c.h.b16 %v189
    %v237 = vunpack.c.l.b16 %v190
    %v238 = vunpack.c.h.b16 %v190
    %v239 = vunpack.c.l.b16 %v191
    %v240 = vunpack.c.h.b16 %v191
    %v241 = vunpack.c.l.b16 %v192
    %v242 = vunpack.c.h.b16 %v192
    %v243 = vunpack.c.l.b16 %v193
    %v244 = vunpack.c.h.b16 %v193
    %v245 = vunpack.c.l.b16 %v194
    %v246 = vunpack.c.h.b16 %v194
    %v247 = vunpack.c.l.b16 %v195
    %v248 = vunpack.c.h.b16 %v195
    %v249 = vunpack.c.l.b16 %v196
    %v250 = vunpack.c.h.b16 %v196
    %v251 = vunpack.c.l.b16 %v197
    %v252 = vunpack.c.h.b16 %v197
    %v253 = vunpack.c.l.b16 %v198
    %v254 = vunpack.c.h.b16 %v198
    %v255 = vunpack.c.l.b16 %v199
    %v256 = vunpack.c.h.b16 %v199
    %v257 = vunpack.c.l.b16 %v200
    %v258 = vunpack.c.h.b16 %v200
    %v259 = vunpack.c.l.b16 %v201
    %v260 = vunpack.c.h.b16 %v201
    %v261 = vunpack.c.l.b16 %v202
    %v262 = vunpack.c.h.b16 %v202
    %v263 = vpack.c.b16 %v233, %v231
    %v264 = vpack.c.b16 %v234, %v232
    %v265 = vpack.c.b16 %v237, %v235
    %v266 = vpack.c.b16 %v238, %v236
    %v267 = vpack.c.b16 %v241, %v239
    %v268 = vpack.c.b16 %v242, %v240
    %v269 = vpack.c.b16 %v245, %v243
    %v270 = vpack.c.b16 %v246, %v244
    %v271 = vpack.c.b16 %v249, %v247
    %v272 = vpack.c.b16 %v250, %v248
    %v273 = vpack.c.b16 %v253, %v251
    %v274 = vpack.c.b16 %v254, %v252
    %v275 = vpack.c.b16 %v257, %v255
    %v276 = vpack.c.b16 %v258, %v256
    %v277 = vpack.c.b16 %v261, %v259
    %v278 = vpack.c.b16 %v262, %v260
    %295 = vmatprep.subr.bf16.mxu0 %v278
    %296 = vmatpush1.bf16.msra.mxu0 %v277
    %297 = vmatprep.subr.bf16.mxu0 %v276
    %298 = vmatpush1.bf16.msra.mxu0 %v275
    %299 = vmatprep.subr.bf16.mxu0 %v274
    %300 = vmatpush1.bf16.msra.mxu0 %v273
    %301 = vmatprep.subr.bf16.mxu0 %v272
    %302 = vmatpush1.bf16.msra.mxu0 %v271
    %303 = vmatprep.subr.bf16.mxu0 %v270
    %304 = vmatpush1.bf16.msra.mxu0 %v269
    %305 = vmatprep.subr.bf16.mxu0 %v268
    %306 = vmatpush1.bf16.msra.mxu0 %v267
    %307 = vmatprep.subr.bf16.mxu0 %v266
    %308 = vmatpush1.bf16.msra.mxu0 %v265
    %309 = vmatprep.subr.bf16.mxu0 %v264
    %310 = vmatpush1.bf16.msra.mxu0 %v263
    %311 = vmatprep.subr.bf16.mxu0 0
    %312 = vmatpush2.bf16.msra.mxu0 0
    %313 = vmatprep.subr.bf16.mxu0 0
    %314 = vmatpush2.bf16.msra.mxu0 0
    %315 = vmatprep.subr.bf16.mxu0 0
    %316 = vmatpush2.bf16.msra.mxu0 0
    %317 = vmatprep.subr.bf16.mxu0 0
    %318 = vmatpush2.bf16.msra.mxu0 0
    %319 = vmatprep.subr.bf16.mxu0 0
    %320 = vmatpush2.bf16.msra.mxu0 0
    %321 = vmatprep.subr.bf16.mxu0 0
    %322 = vmatpush2.bf16.msra.mxu0 0
    %323 = vmatprep.subr.bf16.mxu0 0
    %324 = vmatpush2.bf16.msra.mxu0 0
    %325 = vmatprep.subr.bf16.mxu0 0
    %326 = vmatpush2.bf16.msra.mxu0 0
    %327 = vmatprep.mubr.bf16.mxu0 0
    %328 = vmatmul.mubr.bf16.gmra.mxu0 %v186
    %v329 = vpop.f32.mrf.mxu0
    %v330 = vadd.f32 %v208, %v329
    %v331 = vpop.f32.mrf.mxu0
    %v332 = vadd.f32 %v212, %v331
    %v333 = vpop.f32.mrf.mxu0
    %v334 = vpop.f32.mrf.mxu0
    %335 = vdwg.mxu0
    %v336 = vmax.f32 %v330, 0.0
    %v337 = vmax.f32 %v332, 0.0
    %v338 = vpack.c.bf16 %v336, %v336
    %v339 = vpack.c.bf16 %v337, %v337
    %v340 = vld [vmem:[#allocation8] sm:$0xf]
    %v341 = vld [vmem:[#allocation8 + $0x4] sm:$0xf]
    %v342 = vld [vmem:[#allocation8 + $0x8] sm:$0xf]
    %v343 = vld [vmem:[#allocation8 + $0xc] sm:$0xf]
    %v344 = vld [vmem:[#allocation8 + $0x10] sm:$0xf]
    %v345 = vld [vmem:[#allocation8 + $0x14] sm:$0xf]
    %v346 = vld [vmem:[#allocation8 + $0x18] sm:$0xf]
    %v347 = vld [vmem:[#allocation8 + $0x1c] sm:$0xf]
    %v348 = vld [vmem:[#allocation8 + $0x20] sm:$0xf]
    %v349 = vld [vmem:[#allocation8 + $0x24] sm:$0xf]
    %v350 = vld [vmem:[#allocation8 + $0x28] sm:$0xf]
    %v351 = vld [vmem:[#allocation8 + $0x2c] sm:$0xf]
    %v352 = vld [vmem:[#allocation8 + $0x30] sm:$0xf]
    %v353 = vld [vmem:[#allocation8 + $0x34] sm:$0xf]
    %v354 = vld [vmem:[#allocation8 + $0x38] sm:$0xf]
    %v355 = vld [vmem:[#allocation8 + $0x3c] sm:$0xf]
    %v356 = vld [vmem:[#allocation8 + $0x40] sm:$0xf]
    %v357 = vld [vmem:[#allocation8 + $0x44] sm:$0xf]
    %v358 = vld [vmem:[#allocation8 + $0x48] sm:$0xf]
    %v359 = vld [vmem:[#allocation8 + $0x4c] sm:$0xf]
    %v360 = vld [vmem:[#allocation8 + $0x50] sm:$0xf]
    %v361 = vld [vmem:[#allocation8 + $0x54] sm:$0xf]
    %v362 = vld [vmem:[#allocation8 + $0x58] sm:$0xf]
    %v363 = vld [vmem:[#allocation8 + $0x5c] sm:$0xf]
    %v364 = vld [vmem:[#allocation8 + $0x60] sm:$0xf]
    %v365 = vld [vmem:[#allocation8 + $0x64] sm:$0xf]
    %v366 = vld [vmem:[#allocation8 + $0x68] sm:$0xf]
    %v367 = vld [vmem:[#allocation8 + $0x6c] sm:$0xf]
    %v368 = vld [vmem:[#allocation8 + $0x70] sm:$0xf]
    %v369 = vld [vmem:[#allocation8 + $0x74] sm:$0xf]
    %v370 = vld [vmem:[#allocation8 + $0x78] sm:$0xf]
    %v371 = vld [vmem:[#allocation8 + $0x7c] sm:$0xf]
    %v372 = vld [vmem:[%s6] sm:$0x1]
    %v374 = vlaneseq
    %v375 = vshrl.u32 %v374, 7
    %v376 = vsub.s32 0, %v375
    %v377 = vrot.slane %v372, %v376
    %v411 = vunpack.c.l.b16 %v340
    %v412 = vunpack.c.l.b16 %v341
    %v413 = vunpack.c.l.b16 %v342
    %v414 = vunpack.c.l.b16 %v343
    %v415 = vunpack.c.l.b16 %v344
    %v416 = vunpack.c.l.b16 %v345
    %v417 = vunpack.c.l.b16 %v346
    %v418 = vunpack.c.l.b16 %v347
    %v419 = vunpack.c.l.b16 %v348
    %v420 = vunpack.c.l.b16 %v349
    %v421 = vunpack.c.l.b16 %v350
    %v422 = vunpack.c.l.b16 %v351
    %v423 = vunpack.c.l.b16 %v352
    %v424 = vunpack.c.l.b16 %v353
    %v425 = vunpack.c.l.b16 %v354
    %v426 = vunpack.c.l.b16 %v355
    %v427 = vunpack.c.l.b16 %v356
    %v428 = vunpack.c.l.b16 %v357
    %v429 = vunpack.c.l.b16 %v358
    %v430 = vunpack.c.l.b16 %v359
    %v431 = vunpack.c.l.b16 %v360
    %v432 = vunpack.c.l.b16 %v361
    %v433 = vunpack.c.l.b16 %v362
    %v434 = vunpack.c.l.b16 %v363
    %v435 = vunpack.c.l.b16 %v364
    %v436 = vunpack.c.l.b16 %v365
    %v437 = vunpack.c.l.b16 %v366
    %v438 = vunpack.c.l.b16 %v367
    %v439 = vunpack.c.l.b16 %v368
    %v440 = vunpack.c.l.b16 %v369
    %v441 = vunpack.c.l.b16 %v370
    %v442 = vunpack.c.l.b16 %v371
    %v443 = vpack.c.b16 %v412, %v411
    %v444 = vpack.c.b16 %v414, %v413
    %v445 = vpack.c.b16 %v416, %v415
    %v446 = vpack.c.b16 %v418, %v417
    %v447 = vpack.c.b16 %v420, %v419
    %v448 = vpack.c.b16 %v422, %v421
    %v449 = vpack.c.b16 %v424, %v423
    %v450 = vpack.c.b16 %v426, %v425
    %v451 = vpack.c.b16 %v428, %v427
    %v452 = vpack.c.b16 %v430, %v429
    %v453 = vpack.c.b16 %v432, %v431
    %v454 = vpack.c.b16 %v434, %v433
    %v455 = vpack.c.b16 %v436, %v435
    %v456 = vpack.c.b16 %v438, %v437
    %v457 = vpack.c.b16 %v440, %v439
    %v458 = vpack.c.b16 %v442, %v441
    %475 = vmatprep.subr.bf16.mxu0 0
    %476 = vmatpush1.bf16.msra.mxu0 %v450
    %477 = vmatprep.subr.bf16.mxu0 0
    %478 = vmatpush1.bf16.msra.mxu0 %v449
    %479 = vmatprep.subr.bf16.mxu0 0
    %480 = vmatpush1.bf16.msra.mxu0 %v448
    %481 = vmatprep.subr.bf16.mxu0 0
    %482 = vmatpush1.bf16.msra.mxu0 %v447
    %483 = vmatprep.subr.bf16.mxu0 0
    %484 = vmatpush1.bf16.msra.mxu0 %v446
    %485 = vmatprep.subr.bf16.mxu0 0
    %486 = vmatpush1.bf16.msra.mxu0 %v445
    %487 = vmatprep.subr.bf16.mxu0 0
    %488 = vmatpush1.bf16.msra.mxu0 %v444
    %489 = vmatprep.subr.bf16.mxu0 0
    %490 = vmatpush1.bf16.msra.mxu0 %v443
    %491 = vmatprep.subr.bf16.mxu0 0
    %492 = vmatpush2.bf16.msra.mxu0 %v458
    %493 = vmatprep.subr.bf16.mxu0 0
    %494 = vmatpush2.bf16.msra.mxu0 %v457
    %495 = vmatprep.subr.bf16.mxu0 0
    %496 = vmatpush2.bf16.msra.mxu0 %v456
    %497 = vmatprep.subr.bf16.mxu0 0
    %498 = vmatpush2.bf16.msra.mxu0 %v455
    %499 = vmatprep.subr.bf16.mxu0 0
    %500 = vmatpush2.bf16.msra.mxu0 %v454
    %501 = vmatprep.subr.bf16.mxu0 0
    %502 = vmatpush2.bf16.msra.mxu0 %v453
    %503 = vmatprep.subr.bf16.mxu0 0
    %504 = vmatpush2.bf16.msra.mxu0 %v452
    %505 = vmatprep.subr.bf16.mxu0 0
    %506 = vmatpush2.bf16.msra.mxu0 %v451
    %507 = vmatprep.mubr.bf16.mxu0 %v339
    %508 = vmatmul.mubr.bf16.gmra.mxu0 %v338
    %v509 = vpop.f32.mrf.mxu0
    %v510 = vadd.f32 %v377, %v509
    %v511 = vpop.f32.mrf.mxu0
    %v512 = vpop.f32.mrf.mxu0
    %v513 = vpop.f32.mrf.mxu0
    %514 = vdwg.mxu0
    %v515 = vmax.f32 %v510, 0.0
    %v516 = vpack.c.bf16 %v515, %v515
    %v517 = vld [vmem:[#allocation10] sm:$0xf]
    %v518 = vld [vmem:[#allocation10 + $0x4] sm:$0xf]
    %v519 = vld [vmem:[#allocation10 + $0x8] sm:$0xf]
    %v520 = vld [vmem:[#allocation10 + $0xc] sm:$0xf]
    %v521 = vld [vmem:[#allocation10 + $0x10] sm:$0xf]
    %v522 = vld [vmem:[#allocation10 + $0x14] sm:$0xf]
    %v523 = vld [vmem:[#allocation10 + $0x18] sm:$0xf]
    %v524 = vld [vmem:[#allocation10 + $0x1c] sm:$0xf]
    %v525 = vld [vmem:[#allocation10 + $0x20] sm:$0xf]
    %v526 = vld [vmem:[#allocation10 + $0x24] sm:$0xf]
    %v527 = vld [vmem:[#allocation10 + $0x28] sm:$0xf]
    %v528 = vld [vmem:[#allocation10 + $0x2c] sm:$0xf]
    %v529 = vld [vmem:[#allocation10 + $0x30] sm:$0xf]
    %v530 = vld [vmem:[#allocation10 + $0x34] sm:$0xf]
    %v531 = vld [vmem:[#allocation10 + $0x38] sm:$0xf]
    %v532 = vld [vmem:[#allocation10 + $0x3c] sm:$0xf]
    %v533 = vld [vmem:[%s8] sm:$0x1]
    %v535 = vlaneseq
    %v536 = vshrl.u32 %v535, 7
    %v537 = vsub.s32 0, %v536
    %v538 = vrot.slane %v533, %v537
    %v556 = vunpack.c.l.b16 %v517
    %v557 = vunpack.c.l.b16 %v518
    %v558 = vunpack.c.l.b16 %v519
    %v559 = vunpack.c.l.b16 %v520
    %v560 = vunpack.c.l.b16 %v521
    %v561 = vunpack.c.l.b16 %v522
    %v562 = vunpack.c.l.b16 %v523
    %v563 = vunpack.c.l.b16 %v524
    %v564 = vunpack.c.l.b16 %v525
    %v565 = vunpack.c.l.b16 %v526
    %v566 = vunpack.c.l.b16 %v527
    %v567 = vunpack.c.l.b16 %v528
    %v568 = vunpack.c.l.b16 %v529
    %v569 = vunpack.c.l.b16 %v530
    %v570 = vunpack.c.l.b16 %v531
    %v571 = vunpack.c.l.b16 %v532
    %v572 = vpack.c.b16 %v557, %v556
    %v573 = vpack.c.b16 %v559, %v558
    %v574 = vpack.c.b16 %v561, %v560
    %v575 = vpack.c.b16 %v563, %v562
    %v576 = vpack.c.b16 %v565, %v564
    %v577 = vpack.c.b16 %v567, %v566
    %v578 = vpack.c.b16 %v569, %v568
    %v579 = vpack.c.b16 %v571, %v570
    %588 = vmatprep.subr.bf16.mxu0 0
    %589 = vmatpush1.bf16.msra.mxu0 %v579
    %590 = vmatprep.subr.bf16.mxu0 0
    %591 = vmatpush1.bf16.msra.mxu0 %v578
    %592 = vmatprep.subr.bf16.mxu0 0
    %593 = vmatpush1.bf16.msra.mxu0 %v577
    %594 = vmatprep.subr.bf16.mxu0 0
    %595 = vmatpush1.bf16.msra.mxu0 %v576
    %596 = vmatprep.subr.bf16.mxu0 0
    %597 = vmatpush1.bf16.msra.mxu0 %v575
    %598 = vmatprep.subr.bf16.mxu0 0
    %599 = vmatpush1.bf16.msra.mxu0 %v574
    %600 = vmatprep.subr.bf16.mxu0 0
    %601 = vmatpush1.bf16.msra.mxu0 %v573
    %602 = vmatprep.subr.bf16.mxu0 0
    %603 = vmatpush1.bf16.msra.mxu0 %v572
    %604 = vmatprep.subr.bf16.mxu0 0
    %605 = vmatpush2.bf16.msra.mxu0 0
    %606 = vmatprep.subr.bf16.mxu0 0
    %607 = vmatpush2.bf16.msra.mxu0 0
    %608 = vmatprep.subr.bf16.mxu0 0
    %609 = vmatpush2.bf16.msra.mxu0 0
    %610 = vmatprep.subr.bf16.mxu0 0
    %611 = vmatpush2.bf16.msra.mxu0 0
    %612 = vmatprep.subr.bf16.mxu0 0
    %613 = vmatpush2.bf16.msra.mxu0 0
    %614 = vmatprep.subr.bf16.mxu0 0
    %615 = vmatpush2.bf16.msra.mxu0 0
    %616 = vmatprep.subr.bf16.mxu0 0
    %617 = vmatpush2.bf16.msra.mxu0 0
    %618 = vmatprep.subr.bf16.mxu0 0
    %619 = vmatpush2.bf16.msra.mxu0 0
    %620 = vmatprep.mubr.bf16.mxu0 0
    %621 = vmatmul.mubr.bf16.gmra.mxu0 %v516
    %v622 = vpop.f32.mrf.mxu0
    %v623 = vadd.f32 %v538, %v622
    %v624 = vpop.f32.mrf.mxu0
    %v625 = vpop.f32.mrf.mxu0
    %v626 = vpop.f32.mrf.mxu0
    %627 = vdwg.mxu0
    %628 = vst [vmem:[#allocation11] sm:$0xff] %v623
    // Predicated region
    $region58: #{tpu_custom_call.1} parent=1 // pred_check
      _
    $region59: #{tpu_custom_call.1} parent=1 // pred_check_branch
      %630 = sbr.rel (0) target = $region61
    $region60: #{tpu_custom_call.1} parent=1 // pred_region
      %s632 = ssub.s32 128, 128
      %633 = vsyncadd [#allocation4], %s632
      %s635 = sshll.u32 [#allocation11], 4
      %s636 = int_to_ptr.vmem [resolvable:$true] %s635
      %638 = dma.vmem_to_hbm [thread:$0]  %s636, 128, %s9, [#allocation4]
    $region61: #{tpu_custom_call.1} parent=1 // pred_fallthru
      _
    // Predicated region
    $region62: #{tpu_custom_call.1} parent=1 // pred_check
      _
    $region63: #{tpu_custom_call.1} parent=1 // pred_check_branch
      %640 = sbr.rel (0) target = $region65
    $region64: #{tpu_custom_call.1} parent=1 // pred_region
      %641 = dma.done [#allocation4], 128
    $region65: #{tpu_custom_call.1} parent=1 // pred_fallthru
      _
    %642 = vsyncpa [#allocation3], 1
    %643 = vsyncpa [#allocation6], 1
    %644 = vsyncpa [#allocation9], 1
    %645 = vsyncpa [#allocation4], 1

</llo_original>
